<compile_context>
chip_gen: v7x
topology: tpu7x:2x2x1
jax: 0.10.0
libtpu: 0.0.40
codegen_flags: <defaults>
</compile_context>

<pallas_src>
import jax
import jax.numpy as jnp
from jax.experimental import pallas as pl
from jax.experimental.pallas import tpu as pltpu

LTS_EMBEDDING_SIZE = 32
INPUT_CHANNELS = LTS_EMBEDDING_SIZE
HIDDEN_CHANNELS = 16
OUTPUT_CHANNELS = 1

ROW_PACK = 4                                   # logical rows packed per vreg row
PACKED_IN = INPUT_CHANNELS * ROW_PACK          # 128 (exactly one lane row)
PACKED_HID = HIDDEN_CHANNELS * ROW_PACK        # 64
PACKED_OUT = OUTPUT_CHANNELS * ROW_PACK        # 4

DEFAULT_TILE_N = 16384  # original rows per grid step (packed tile = 4096 rows)


def _round_up(x, m):
    return ((x + m - 1) // m) * m


def _mlp_packed_kernel(x_ref, w1_ref, b1_ref, w2_ref, b2_ref, w3_ref, b3_ref, o_ref):
    # x_ref: (tn4, 128) f32, 4 logical rows packed along lanes.
    # NOTE: on a ragged final tile the out-of-bounds rows contain garbage; those
    # rows are discarded on store, so never reduce across rows in this kernel.
    x = x_ref[...].astype(jnp.bfloat16)          # in-kernel cast: x read once from HBM

    # fc1 + relu (block-diagonal weights; MXU bf16 x bf16 -> f32 accumulate, K=128)
    h = jnp.dot(x, w1_ref[...], preferred_element_type=jnp.float32) + b1_ref[...]
    h = jnp.maximum(h, 0.0).astype(jnp.bfloat16)     # (tn4, 64)

    # fc2 + relu
    h = jnp.dot(h, w2_ref[...], preferred_element_type=jnp.float32) + b2_ref[...]
    h = jnp.maximum(h, 0.0).astype(jnp.bfloat16)     # (tn4, 64)

    # fc3 (no activation)
    out = jnp.dot(h, w3_ref[...], preferred_element_type=jnp.float32) + b3_ref[...]
    o_ref[...] = out                                  # (tn4, 4) f32


def lts_regression_forward(x, params, *, tile_n=DEFAULT_TILE_N):
    """x: [N, INPUT_CHANNELS] float32 -> [N, OUTPUT_CHANNELS] float32."""
    w1, b1, w2, b2, w3, b3 = params
    n = x.shape[0]

    # --- Pack weights block-diagonally (4 logical rows per vreg row). ---
    # These are tiny (<= 128x64) and computed once per call; in a real
    # deployment they would be pre-packed alongside the checkpoint.
    eye = jnp.eye(ROW_PACK, dtype=jnp.float32)
    w1p = jnp.kron(eye, w1).astype(jnp.bfloat16)   # (128, 64)
    w2p = jnp.kron(eye, w2).astype(jnp.bfloat16)   # (64, 64)
    w3p = jnp.kron(eye, w3).astype(jnp.bfloat16)   # (64, 4)
    b1p = jnp.tile(b1, (1, ROW_PACK))              # (1, 64) f32
    b2p = jnp.tile(b2, (1, ROW_PACK))              # (1, 64) f32
    b3p = jnp.tile(b3, (1, ROW_PACK))              # (1, 4)  f32

    # --- Pack x: (N, 32) -> (N/4, 128). Row-major relabel => no HBM copy. ---
    # (The jnp.pad below only copies when N % 4 != 0.)
    n_pad = _round_up(n, ROW_PACK)
    xp = x if n_pad == n else jnp.pad(x, ((0, n_pad - n), (0, 0)))
    xp = xp.reshape(n_pad // ROW_PACK, PACKED_IN)
    n4 = xp.shape[0]

    # Packed tile size: multiple of 8 sublanes; full-extent block for tiny N.
    tile4 = _round_up(max(tile_n // ROW_PACK, 8), 8)
    tn4 = n4 if n4 <= tile4 else tile4
    grid = (pl.cdiv(n4, tn4),)

    # Full-array, VMEM-resident blocks for weights/biases (DMA'd once).
    resident = lambda a: pl.BlockSpec(a.shape, lambda i: (0,) * a.ndim)

    out_packed = pl.pallas_call(
        _mlp_packed_kernel,
        out_shape=jax.ShapeDtypeStruct((n4, PACKED_OUT), jnp.float32),
        grid=grid,
        in_specs=[
            pl.BlockSpec((tn4, PACKED_IN), lambda i: (i, 0)),   # packed x tile
            resident(w1p), resident(b1p),
            resident(w2p), resident(b2p),
            resident(w3p), resident(b3p),
        ],
        out_specs=pl.BlockSpec((tn4, PACKED_OUT), lambda i: (i, 0)),
        compiler_params=pltpu.CompilerParams(
            # Batch tiles are independent -> shard across v7x's 2 TensorCores
            # (no-op on v5e/v6e, which have a single TC).
            dimension_semantics=("parallel",),
            # Re-derived for the packed layout at tn4=4096: ~4 MiB x buffers +
            # ~4 MiB lane-padded out buffers + a few MiB of intermediates,
            # well under this budget on v5e/v6e/v7x.
            vmem_limit_bytes=32 * 1024 * 1024,
        ),
    )(xp, w1p, b1p, w2p, b2p, w3p, b3p)

    # Unpack (N/4, 4) -> (N, 1) (free row-major relabel), drop padding rows.
    out = out_packed.reshape(n_pad, OUTPUT_CHANNELS)
    return out[:n] if n_pad != n else out


def init_params(key):
    """Deterministic init mimicking torch.nn.Linear's U(-1/sqrt(fan_in), +)."""
    def linear(key, fan_in, fan_out):
        kw, kb = jax.random.split(key)
        bound = 1.0 / jnp.sqrt(jnp.float32(fan_in))
        # Stored as [in, out] (pre-transposed relative to PyTorch's [out, in]).
        w = jax.random.uniform(kw, (fan_in, fan_out), jnp.float32, -bound, bound)
        b = jax.random.uniform(kb, (1, fan_out), jnp.float32, -bound, bound)
        return w, b

    k1, k2, k3 = jax.random.split(key, 3)
    w1, b1 = linear(k1, INPUT_CHANNELS, HIDDEN_CHANNELS)
    w2, b2 = linear(k2, HIDDEN_CHANNELS, HIDDEN_CHANNELS)
    w3, b3 = linear(k3, HIDDEN_CHANNELS, OUTPUT_CHANNELS)
    return (w1, b1, w2, b2, w3, b3)


def reference_forward_bf16(x, params):
    """Pure-JAX reference matching the kernel's bf16-in / f32-accumulate math."""
    w1, b1, w2, b2, w3, b3 = params
    xb = x.astype(jnp.bfloat16)
    w1b, w2b, w3b = (w.astype(jnp.bfloat16) for w in (w1, w2, w3))
    h = jnp.maximum(jnp.dot(xb, w1b, preferred_element_type=jnp.float32) + b1, 0.0)
    h = jnp.maximum(
        jnp.dot(h.astype(jnp.bfloat16), w2b, preferred_element_type=jnp.float32) + b2, 0.0)
    return jnp.dot(h.astype(jnp.bfloat16), w3b, preferred_element_type=jnp.float32) + b3


def reference_forward_f32(x, params):
    """Full-precision reference (loose sanity check only)."""
    w1, b1, w2, b2, w3, b3 = params
    h = jnp.maximum(x @ w1 + b1, 0.0)
    h = jnp.maximum(h @ w2 + b2, 0.0)
    return h @ w3 + b3


if __name__ == "__main__":
    key = jax.random.PRNGKey(0)
    kx1, kx2, kx3, kp = jax.random.split(key, 4)
    params = init_params(kp)

    # Case 1: small batch, single full-extent block (N=8 -> 2 packed rows).
    x1 = jax.random.normal(kx1, (8, INPUT_CHANNELS), dtype=jnp.float32)
    out1 = jax.block_until_ready(lts_regression_forward(x1, params))
    ref1 = reference_forward_bf16(x1, params)
    assert out1.shape == (8, OUTPUT_CHANNELS), out1.shape
    assert jnp.allclose(out1, ref1, atol=1e-2, rtol=1e-2), (
        f"max abs err = {jnp.max(jnp.abs(out1 - ref1))}")
    # Loose sanity check against full-f32 math (bf16 quantization only).
    assert jnp.allclose(out1, reference_forward_f32(x1, params), atol=0.15, rtol=0.15)

    # Case 2: multi-tile grid (grid=2) with a ragged final packed tile,
    # exercising the pipelined path with small shapes (tile_n=32 -> tn4=8, N=60).
    x2 = jax.random.normal(kx2, (60, INPUT_CHANNELS), dtype=jnp.float32)
    out2 = jax.block_until_ready(lts_regression_forward(x2, params, tile_n=32))
    ref2 = reference_forward_bf16(x2, params)
    assert out2.shape == (60, OUTPUT_CHANNELS), out2.shape
    assert jnp.allclose(out2, ref2, atol=1e-2, rtol=1e-2), (
        f"max abs err = {jnp.max(jnp.abs(out2 - ref2))}")

    # Case 3: N not a multiple of ROW_PACK (exercises the pad/unpad path).
    x3 = jax.random.normal(kx3, (10, INPUT_CHANNELS), dtype=jnp.float32)
    out3 = jax.block_until_ready(lts_regression_forward(x3, params))
    ref3 = reference_forward_bf16(x3, params)
    assert out3.shape == (10, OUTPUT_CHANNELS), out3.shape
    assert jnp.allclose(out3, ref3, atol=1e-2, rtol=1e-2), (
        f"max abs err = {jnp.max(jnp.abs(out3 - ref3))}")

    print("KERNEL_OK")
</pallas_src>

<mosaic_0001>
module attributes {stable_mosaic.version = 11 : i64} {
  func.func @_mlp_packed_kernel(%arg0: i32, %arg1: memref<2x128xf32, #tpu.memory_space<vmem>>, %arg2: memref<128x64xbf16, #tpu.memory_space<vmem>>, %arg3: memref<1x64xf32, #tpu.memory_space<vmem>>, %arg4: memref<64x64xbf16, #tpu.memory_space<vmem>>, %arg5: memref<1x64xf32, #tpu.memory_space<vmem>>, %arg6: memref<64x4xbf16, #tpu.memory_space<vmem>>, %arg7: memref<1x4xf32, #tpu.memory_space<vmem>>, %arg8: memref<2x4xf32, #tpu.memory_space<vmem>>) attributes {dimension_semantics = [#tpu.dimension_semantics<parallel>], iteration_bounds = array<i64: 1>, scalar_prefetch = 0 : i64, scratch_operands = 0 : i64, tpu.core_type = #tpu.core_type<tc>, window_params = [{transform_indices = @transform_0, window_bounds = array<i64: 2, 128>}, {pipeline_mode = #tpu.pipeline_mode<synchronous>, transform_indices = @transform_1, window_bounds = array<i64: 128, 64>}, {pipeline_mode = #tpu.pipeline_mode<synchronous>, transform_indices = @transform_2, window_bounds = array<i64: 1, 64>}, {pipeline_mode = #tpu.pipeline_mode<synchronous>, transform_indices = @transform_3, window_bounds = array<i64: 64, 64>}, {pipeline_mode = #tpu.pipeline_mode<synchronous>, transform_indices = @transform_4, window_bounds = array<i64: 1, 64>}, {pipeline_mode = #tpu.pipeline_mode<synchronous>, transform_indices = @transform_5, window_bounds = array<i64: 64, 4>}, {pipeline_mode = #tpu.pipeline_mode<synchronous>, transform_indices = @transform_6, window_bounds = array<i64: 1, 4>}, {transform_indices = @transform_7, window_bounds = array<i64: 2, 4>}]} {
    %c0 = arith.constant 0 : index
    %c0_0 = arith.constant 0 : index
    %0 = vector.load %arg1[%c0, %c0_0] : memref<2x128xf32, #tpu.memory_space<vmem>>, vector<2x128xf32>
    %1 = arith.truncf %0 : vector<2x128xf32> to vector<2x128xbf16>
    %c0_1 = arith.constant 0 : index
    %c0_2 = arith.constant 0 : index
    %2 = vector.load %arg2[%c0_1, %c0_2] : memref<128x64xbf16, #tpu.memory_space<vmem>>, vector<128x64xbf16>
    %cst = arith.constant dense<0.000000e+00> : vector<2x64xf32>
    %3 = tpu.matmul %1, %2, %cst {dimension_numbers = #tpu.dot_dimension_numbers<[1], [0], [0], [1], [0, 0, 1, 1], [], []>} : vector<2x128xbf16>, vector<128x64xbf16>, vector<2x64xf32> -> vector<2x64xf32>
    %c0_3 = arith.constant 0 : index
    %c0_4 = arith.constant 0 : index
    %4 = vector.load %arg3[%c0_3, %c0_4] : memref<1x64xf32, #tpu.memory_space<vmem>>, vector<1x64xf32>
    %5 = vector.broadcast %4 : vector<1x64xf32> to vector<2x64xf32>
    %6 = arith.addf %3, %5 : vector<2x64xf32>
    %cst_5 = arith.constant 0.000000e+00 : f32
    %7 = vector.broadcast %cst_5 : f32 to vector<2x64xf32>
    %8 = arith.maximumf %6, %7 : vector<2x64xf32>
    %9 = arith.truncf %8 : vector<2x64xf32> to vector<2x64xbf16>
    %c0_6 = arith.constant 0 : index
    %c0_7 = arith.constant 0 : index
    %10 = vector.load %arg4[%c0_6, %c0_7] : memref<64x64xbf16, #tpu.memory_space<vmem>>, vector<64x64xbf16>
    %cst_8 = arith.constant dense<0.000000e+00> : vector<2x64xf32>
    %11 = tpu.matmul %9, %10, %cst_8 {dimension_numbers = #tpu.dot_dimension_numbers<[1], [0], [0], [1], [0, 0, 1, 1], [], []>} : vector<2x64xbf16>, vector<64x64xbf16>, vector<2x64xf32> -> vector<2x64xf32>
    %c0_9 = arith.constant 0 : index
    %c0_10 = arith.constant 0 : index
    %12 = vector.load %arg5[%c0_9, %c0_10] : memref<1x64xf32, #tpu.memory_space<vmem>>, vector<1x64xf32>
    %13 = vector.broadcast %12 : vector<1x64xf32> to vector<2x64xf32>
    %14 = arith.addf %11, %13 : vector<2x64xf32>
    %cst_11 = arith.constant 0.000000e+00 : f32
    %15 = vector.broadcast %cst_11 : f32 to vector<2x64xf32>
    %16 = arith.maximumf %14, %15 : vector<2x64xf32>
    %17 = arith.truncf %16 : vector<2x64xf32> to vector<2x64xbf16>
    %c0_12 = arith.constant 0 : index
    %c0_13 = arith.constant 0 : index
    %18 = vector.load %arg6[%c0_12, %c0_13] : memref<64x4xbf16, #tpu.memory_space<vmem>>, vector<64x4xbf16>
    %cst_14 = arith.constant dense<0.000000e+00> : vector<2x4xf32>
    %19 = tpu.matmul %17, %18, %cst_14 {dimension_numbers = #tpu.dot_dimension_numbers<[1], [0], [0], [1], [0, 0, 1, 1], [], []>} : vector<2x64xbf16>, vector<64x4xbf16>, vector<2x4xf32> -> vector<2x4xf32>
    %c0_15 = arith.constant 0 : index
    %c0_16 = arith.constant 0 : index
    %20 = vector.load %arg7[%c0_15, %c0_16] : memref<1x4xf32, #tpu.memory_space<vmem>>, vector<1x4xf32>
    %21 = vector.broadcast %20 : vector<1x4xf32> to vector<2x4xf32>
    %22 = arith.addf %19, %21 : vector<2x4xf32>
    %c0_17 = arith.constant 0 : index
    %c0_18 = arith.constant 0 : index
    %23 = vector.load %arg8[%c0_17, %c0_18] : memref<2x4xf32, #tpu.memory_space<vmem>>, vector<2x4xf32>
    tpu.vector_store %arg8[%c0_17, %c0_18], %22 {strides = array<i32>} : memref<2x4xf32, #tpu.memory_space<vmem>>, vector<2x4xf32>,
    return
  }
  func.func @transform_0(%arg0: i32) -> (i32, i32) {
    %c0_i32 = arith.constant 0 : i32
    %c0_i32_0 = arith.constant 0 : i32
    return %arg0, %c0_i32 : i32, i32
  }
  func.func @transform_1(%arg0: i32) -> (i32, i32) {
    %c0_i32 = arith.constant 0 : i32
    %c0_i32_0 = arith.constant 0 : i32
    %c0_i32_1 = arith.constant 0 : i32
    return %c0_i32, %c0_i32_0 : i32, i32
  }
  func.func @transform_2(%arg0: i32) -> (i32, i32) {
    %c0_i32 = arith.constant 0 : i32
    %c0_i32_0 = arith.constant 0 : i32
    %c0_i32_1 = arith.constant 0 : i32
    return %c0_i32, %c0_i32_0 : i32, i32
  }
  func.func @transform_3(%arg0: i32) -> (i32, i32) {
    %c0_i32 = arith.constant 0 : i32
    %c0_i32_0 = arith.constant 0 : i32
    %c0_i32_1 = arith.constant 0 : i32
    return %c0_i32, %c0_i32_0 : i32, i32
  }
  func.func @transform_4(%arg0: i32) -> (i32, i32) {
    %c0_i32 = arith.constant 0 : i32
    %c0_i32_0 = arith.constant 0 : i32
    %c0_i32_1 = arith.constant 0 : i32
    return %c0_i32, %c0_i32_0 : i32, i32
  }
  func.func @transform_5(%arg0: i32) -> (i32, i32) {
    %c0_i32 = arith.constant 0 : i32
    %c0_i32_0 = arith.constant 0 : i32
    %c0_i32_1 = arith.constant 0 : i32
    return %c0_i32, %c0_i32_0 : i32, i32
  }
  func.func @transform_6(%arg0: i32) -> (i32, i32) {
    %c0_i32 = arith.constant 0 : i32
    %c0_i32_0 = arith.constant 0 : i32
    %c0_i32_1 = arith.constant 0 : i32
    return %c0_i32, %c0_i32_0 : i32, i32
  }
  func.func @transform_7(%arg0: i32) -> (i32, i32) {
    %c0_i32 = arith.constant 0 : i32
    %c0_i32_0 = arith.constant 0 : i32
    return %arg0, %c0_i32 : i32, i32
  }
}

</mosaic_0001>

<llo_original>
// kernel: tpu_custom_call.1
$region0: #{tpu_custom_call.1}
  #allocation0 [shape = 'u32[]', space=smem, size = 0x4, offset = 0x4, fixed_abs, tag = 'smem constant byte address 0x4 - core index']
  #allocation1 [shape = 'u32[144,128]{1,0:T(1,128)}', space=vmem, size = 0x12000, scoped, tag = 'internal scratch']
  %s0 = inlined_call_operand.vmem [shape: f32[2,128], index: 0, kind: input, shape index: {}]
  %s1 = inlined_call_operand.vmem [shape: bf16[128,64], index: 1, kind: input, shape index: {}]
  %s2 = inlined_call_operand.vmem [shape: f32[1,64], index: 2, kind: input, shape index: {}]
  %s3 = inlined_call_operand.vmem [shape: bf16[64,64], index: 3, kind: input, shape index: {}]
  %s4 = inlined_call_operand.vmem [shape: f32[1,64], index: 4, kind: input, shape index: {}]
  %s5 = inlined_call_operand.vmem [shape: bf16[64,4], index: 5, kind: input, shape index: {}]
  %s6 = inlined_call_operand.vmem [shape: f32[1,4], index: 6, kind: input, shape index: {}]
  %s7 = inlined_call_operand.hbm [shape: f32[2,4], index: 7, kind: output, shape index: {}]
  %s8 = sld [smem:[#allocation0]]
  $region38: #{tpu_custom_call.1} parent=0
    _
  %s10 = ssub.s32 1, %s8
  %s11 = scalar_select 0, %s10, %s8
  $region1: #{tpu_custom_call.1} parent=0
    #allocation2 [shape = 'u8[1024]{0}', space=vmem, size = 0x400, scoped, tag = 'output window, operand 0, single buffered']
    #allocation3 [shape = 's32[1]{0}', space=sflag, size = 0x4, scoped, tag = 'scoped memory for tpu_custom_call.1']
    %12 = vsyncpa [#allocation3], 0
    // Predicated region
    $region2: #{tpu_custom_call.1} parent=1 // pred_check
      _
    $region3: #{tpu_custom_call.1} parent=1 // pred_check_branch
      %14 = sbr.rel (0) target = $region5
    $region4: #{tpu_custom_call.1} parent=1 // pred_region
      _
    $region5: #{tpu_custom_call.1} parent=1 // pred_fallthru
      _
    // Predicated region
    $region6: #{tpu_custom_call.1} parent=1 // pred_check
      _
    $region7: #{tpu_custom_call.1} parent=1 // pred_check_branch
      %16 = sbr.rel (0) target = $region9
    $region8: #{tpu_custom_call.1} parent=1 // pred_region
      _
    $region9: #{tpu_custom_call.1} parent=1 // pred_fallthru
      _
    // Predicated region
    $region10: #{tpu_custom_call.1} parent=1 // pred_check
      _
    $region11: #{tpu_custom_call.1} parent=1 // pred_check_branch
      %18 = sbr.rel (0) target = $region13
    $region12: #{tpu_custom_call.1} parent=1 // pred_region
      _
    $region13: #{tpu_custom_call.1} parent=1 // pred_fallthru
      _
    // Predicated region
    $region14: #{tpu_custom_call.1} parent=1 // pred_check
      _
    $region15: #{tpu_custom_call.1} parent=1 // pred_check_branch
      %20 = sbr.rel (0) target = $region17
    $region16: #{tpu_custom_call.1} parent=1 // pred_region
      _
    $region17: #{tpu_custom_call.1} parent=1 // pred_fallthru
      _
    // Predicated region
    $region18: #{tpu_custom_call.1} parent=1 // pred_check
      _
    $region19: #{tpu_custom_call.1} parent=1 // pred_check_branch
      %22 = sbr.rel (0) target = $region21
    $region20: #{tpu_custom_call.1} parent=1 // pred_region
      _
    $region21: #{tpu_custom_call.1} parent=1 // pred_fallthru
      _
    // Predicated region
    $region22: #{tpu_custom_call.1} parent=1 // pred_check
      _
    $region23: #{tpu_custom_call.1} parent=1 // pred_check_branch
      %24 = sbr.rel (0) target = $region25
    $region24: #{tpu_custom_call.1} parent=1 // pred_region
      _
    $region25: #{tpu_custom_call.1} parent=1 // pred_fallthru
      _
    // Predicated region
    $region26: #{tpu_custom_call.1} parent=1 // pred_check
      _
    $region27: #{tpu_custom_call.1} parent=1 // pred_check_branch
      %26 = sbr.rel (0) target = $region29
    $region28: #{tpu_custom_call.1} parent=1 // pred_region
      _
    $region29: #{tpu_custom_call.1} parent=1 // pred_fallthru
      _
    %v28 = vld [vmem:[%s0] sm:$0x3]
    %v29 = vpack.c.bf16 %v28, %v28
    %v30 = vld [vmem:[%s1] sm:$0xf]
    %v31 = vld [vmem:[%s1 + $0x4] sm:$0xf]
    %v32 = vld [vmem:[%s1 + $0x8] sm:$0xf]
    %v33 = vld [vmem:[%s1 + $0xc] sm:$0xf]
    %v34 = vld [vmem:[%s1 + $0x10] sm:$0xf]
    %v35 = vld [vmem:[%s1 + $0x14] sm:$0xf]
    %v36 = vld [vmem:[%s1 + $0x18] sm:$0xf]
    %v37 = vld [vmem:[%s1 + $0x1c] sm:$0xf]
    %v38 = vld [vmem:[%s1 + $0x20] sm:$0xf]
    %v39 = vld [vmem:[%s1 + $0x24] sm:$0xf]
    %v40 = vld [vmem:[%s1 + $0x28] sm:$0xf]
    %v41 = vld [vmem:[%s1 + $0x2c] sm:$0xf]
    %v42 = vld [vmem:[%s1 + $0x30] sm:$0xf]
    %v43 = vld [vmem:[%s1 + $0x34] sm:$0xf]
    %v44 = vld [vmem:[%s1 + $0x38] sm:$0xf]
    %v45 = vld [vmem:[%s1 + $0x3c] sm:$0xf]
    %v46 = vld [vmem:[%s2] sm:$0x1]
    %v48 = vlaneseq
    %v49 = vshrl.u32 %v48, 7
    %v50 = vsub.s32 0, %v49
    %v51 = vrot.slane %v46, %v50
    %v69 = vunpack.c.l.b16 %v30
    %v70 = vunpack.c.l.b16 %v31
    %v71 = vunpack.c.l.b16 %v32
    %v72 = vunpack.c.l.b16 %v33
    %v73 = vunpack.c.l.b16 %v34
    %v74 = vunpack.c.l.b16 %v35
    %v75 = vunpack.c.l.b16 %v36
    %v76 = vunpack.c.l.b16 %v37
    %v77 = vunpack.c.l.b16 %v38
    %v78 = vunpack.c.l.b16 %v39
    %v79 = vunpack.c.l.b16 %v40
    %v80 = vunpack.c.l.b16 %v41
    %v81 = vunpack.c.l.b16 %v42
    %v82 = vunpack.c.l.b16 %v43
    %v83 = vunpack.c.l.b16 %v44
    %v84 = vunpack.c.l.b16 %v45
    %v85 = vpack.c.b16 %v70, %v69
    %v86 = vpack.c.b16 %v72, %v71
    %v87 = vpack.c.b16 %v74, %v73
    %v88 = vpack.c.b16 %v76, %v75
    %v89 = vpack.c.b16 %v78, %v77
    %v90 = vpack.c.b16 %v80, %v79
    %v91 = vpack.c.b16 %v82, %v81
    %v92 = vpack.c.b16 %v84, %v83
    %101 = vmatprep.subr.bf16.mxu0 0
    %102 = vmatpush1.bf16.msra.mxu0 %v85
    %103 = vmatprep.subr.bf16.mxu0 0
    %104 = vmatpush1.bf16.msra.mxu0 %v86
    %105 = vmatprep.subr.bf16.mxu0 0
    %106 = vmatpush1.bf16.msra.mxu0 %v87
    %107 = vmatprep.subr.bf16.mxu0 0
    %108 = vmatpush1.bf16.msra.mxu0 %v88
    %109 = vmatprep.subr.bf16.mxu0 0
    %110 = vmatpush1.bf16.msra.mxu0 %v89
    %111 = vmatprep.subr.bf16.mxu0 0
    %112 = vmatpush1.bf16.msra.mxu0 %v90
    %113 = vmatprep.subr.bf16.mxu0 0
    %114 = vmatpush1.bf16.msra.mxu0 %v91
    %115 = vmatprep.subr.bf16.mxu0 0
    %116 = vmatpush1.bf16.msra.mxu0 %v92
    %117 = vmatprep.subr.bf16.mxu0 0
    %118 = vmatpush1.bf16.msra.mxu0 0
    %119 = vmatprep.subr.bf16.mxu0 0
    %120 = vmatpush1.bf16.msra.mxu0 0
    %121 = vmatprep.subr.bf16.mxu0 0
    %122 = vmatpush1.bf16.msra.mxu0 0
    %123 = vmatprep.subr.bf16.mxu0 0
    %124 = vmatpush1.bf16.msra.mxu0 0
    %125 = vmatprep.subr.bf16.mxu0 0
    %126 = vmatpush1.bf16.msra.mxu0 0
    %127 = vmatprep.subr.bf16.mxu0 0
    %128 = vmatpush1.bf16.msra.mxu0 0
    %129 = vmatprep.subr.bf16.mxu0 0
    %130 = vmatpush1.bf16.msra.mxu0 0
    %131 = vmatprep.subr.bf16.mxu0 0
    %132 = vmatpush1.bf16.msra.mxu0 0
    %133 = vmatprep.mubr.bf16.mxu0 0
    %134 = vmatmul.mubr.bf16.gmra.mrb[0].mxu0 %v29
    %v135 = vpop.f32.mrb[0].mxu0
    %v136 = vadd.f32 %v51, %v135
    %v137 = vpop.f32.mrb[0].mxu0
    %v138 = vpop.f32.mrb[0].mxu0
    %v139 = vpop.f32.mrb[0].mxu0
    %140 = vdwg.mxu0
    %v141 = vmax.f32 %v136, 0.0
    %v142 = vpack.c.bf16 %v141, %v141
    %v143 = vld [vmem:[%s3] sm:$0xf]
    %v144 = vld [vmem:[%s3 + $0x4] sm:$0xf]
    %v145 = vld [vmem:[%s3 + $0x8] sm:$0xf]
    %v146 = vld [vmem:[%s3 + $0xc] sm:$0xf]
    %v147 = vld [vmem:[%s3 + $0x10] sm:$0xf]
    %v148 = vld [vmem:[%s3 + $0x14] sm:$0xf]
    %v149 = vld [vmem:[%s3 + $0x18] sm:$0xf]
    %v150 = vld [vmem:[%s3 + $0x1c] sm:$0xf]
    %v151 = vld [vmem:[%s4] sm:$0x1]
    %v153 = vlaneseq
    %v154 = vshrl.u32 %v153, 7
    %v155 = vsub.s32 0, %v154
    %v156 = vrot.slane %v151, %v155
    %v166 = vunpack.c.l.b16 %v143
    %v167 = vunpack.c.l.b16 %v144
    %v168 = vunpack.c.l.b16 %v145
    %v169 = vunpack.c.l.b16 %v146
    %v170 = vunpack.c.l.b16 %v147
    %v171 = vunpack.c.l.b16 %v148
    %v172 = vunpack.c.l.b16 %v149
    %v173 = vunpack.c.l.b16 %v150
    %v174 = vpack.c.b16 %v167, %v166
    %v175 = vpack.c.b16 %v169, %v168
    %v176 = vpack.c.b16 %v171, %v170
    %v177 = vpack.c.b16 %v173, %v172
    %vm182 = vcmask 523264
    %v184 = vsel %vm182, %v142, 0
    %186 = vmatprep.subr.bf16.mxu0 0
    %187 = vmatpush1.bf16.msra.mxu0 %v174
    %188 = vmatprep.subr.bf16.mxu0 0
    %189 = vmatpush1.bf16.msra.mxu0 %v175
    %190 = vmatprep.subr.bf16.mxu0 0
    %191 = vmatpush1.bf16.msra.mxu0 %v176
    %192 = vmatprep.subr.bf16.mxu0 0
    %193 = vmatpush1.bf16.msra.mxu0 %v177
    %194 = vmatprep.subr.bf16.mxu0 0
    %195 = vmatpush1.bf16.msra.mxu0 0
    %196 = vmatprep.subr.bf16.mxu0 0
    %197 = vmatpush1.bf16.msra.mxu0 0
    %198 = vmatprep.subr.bf16.mxu0 0
    %199 = vmatpush1.bf16.msra.mxu0 0
    %200 = vmatprep.subr.bf16.mxu0 0
    %201 = vmatpush1.bf16.msra.mxu0 0
    %202 = vmatprep.subr.bf16.mxu0 0
    %203 = vmatpush1.bf16.msra.mxu0 0
    %204 = vmatprep.subr.bf16.mxu0 0
    %205 = vmatpush1.bf16.msra.mxu0 0
    %206 = vmatprep.subr.bf16.mxu0 0
    %207 = vmatpush1.bf16.msra.mxu0 0
    %208 = vmatprep.subr.bf16.mxu0 0
    %209 = vmatpush1.bf16.msra.mxu0 0
    %210 = vmatprep.subr.bf16.mxu0 0
    %211 = vmatpush1.bf16.msra.mxu0 0
    %212 = vmatprep.subr.bf16.mxu0 0
    %213 = vmatpush1.bf16.msra.mxu0 0
    %214 = vmatprep.subr.bf16.mxu0 0
    %215 = vmatpush1.bf16.msra.mxu0 0
    %216 = vmatprep.subr.bf16.mxu0 0
    %217 = vmatpush1.bf16.msra.mxu0 0
    %218 = vmatprep.mubr.bf16.mxu0 0
    %219 = vmatmul.mubr.bf16.gmra.mrb[0].mxu0 %v184
    %v220 = vpop.f32.mrb[0].mxu0
    %v221 = vadd.f32 %v156, %v220
    %v222 = vpop.f32.mrb[0].mxu0
    %v223 = vpop.f32.mrb[0].mxu0
    %v224 = vpop.f32.mrb[0].mxu0
    %225 = vdwg.mxu0
    %v226 = vmax.f32 %v221, 0.0
    %v227 = vpack.c.bf16 %v226, %v226
    %v228 = vld [vmem:[%s5] sm:$0xf]
    %v229 = vld [vmem:[%s5 + $0x4] sm:$0xf]
    %v230 = vld [vmem:[%s5 + $0x8] sm:$0xf]
    %v231 = vld [vmem:[%s5 + $0xc] sm:$0xf]
    %v232 = vld [vmem:[%s5 + $0x10] sm:$0xf]
    %v233 = vld [vmem:[%s5 + $0x14] sm:$0xf]
    %v234 = vld [vmem:[%s5 + $0x18] sm:$0xf]
    %v235 = vld [vmem:[%s5 + $0x1c] sm:$0xf]
    %v236 = vld [vmem:[%s6] sm:$0x1]
    %v238 = vlaneseq
    %v239 = vshrl.u32 %v238, 7
    %v240 = vsub.s32 0, %v239
    %v241 = vrot.slane %v236, %v240
    %v251 = vunpack.c.l.b16 %v228
    %v252 = vunpack.c.l.b16 %v229
    %v253 = vunpack.c.l.b16 %v230
    %v254 = vunpack.c.l.b16 %v231
    %v255 = vunpack.c.l.b16 %v232
    %v256 = vunpack.c.l.b16 %v233
    %v257 = vunpack.c.l.b16 %v234
    %v258 = vunpack.c.l.b16 %v235
    %v259 = vpack.c.b16 %v252, %v251
    %v260 = vpack.c.b16 %v254, %v253
    %v261 = vpack.c.b16 %v256, %v255
    %v262 = vpack.c.b16 %v258, %v257
    %v268 = vsel %vm182, %v227, 0
    %270 = vmatprep.subr.bf16.mxu0 0
    %271 = vmatpush1.bf16.msra.mxu0 %v259
    %272 = vmatprep.subr.bf16.mxu0 0
    %273 = vmatpush1.bf16.msra.mxu0 %v260
    %274 = vmatprep.subr.bf16.mxu0 0
    %275 = vmatpush1.bf16.msra.mxu0 %v261
    %276 = vmatprep.subr.bf16.mxu0 0
    %277 = vmatpush1.bf16.msra.mxu0 %v262
    %278 = vmatprep.subr.bf16.mxu0 0
    %279 = vmatpush1.bf16.msra.mxu0 0
    %280 = vmatprep.subr.bf16.mxu0 0
    %281 = vmatpush1.bf16.msra.mxu0 0
    %282 = vmatprep.subr.bf16.mxu0 0
    %283 = vmatpush1.bf16.msra.mxu0 0
    %284 = vmatprep.subr.bf16.mxu0 0
    %285 = vmatpush1.bf16.msra.mxu0 0
    %286 = vmatprep.subr.bf16.mxu0 0
    %287 = vmatpush1.bf16.msra.mxu0 0
    %288 = vmatprep.subr.bf16.mxu0 0
    %289 = vmatpush1.bf16.msra.mxu0 0
    %290 = vmatprep.subr.bf16.mxu0 0
    %291 = vmatpush1.bf16.msra.mxu0 0
    %292 = vmatprep.subr.bf16.mxu0 0
    %293 = vmatpush1.bf16.msra.mxu0 0
    %294 = vmatprep.subr.bf16.mxu0 0
    %295 = vmatpush1.bf16.msra.mxu0 0
    %296 = vmatprep.subr.bf16.mxu0 0
    %297 = vmatpush1.bf16.msra.mxu0 0
    %298 = vmatprep.subr.bf16.mxu0 0
    %299 = vmatpush1.bf16.msra.mxu0 0
    %300 = vmatprep.subr.bf16.mxu0 0
    %301 = vmatpush1.bf16.msra.mxu0 0
    %302 = vmatprep.mubr.bf16.mxu0 0
    %303 = vmatmul.mubr.bf16.gmra.mrb[0].mxu0 %v268
    %v304 = vpop.f32.mrb[0].mxu0
    %v305 = vadd.f32 %v241, %v304
    %v306 = vpop.f32.mrb[0].mxu0
    %v307 = vpop.f32.mrb[0].mxu0
    %v308 = vpop.f32.mrb[0].mxu0
    %309 = vdwg.mxu0
    %vm310 = vcmask 25600
    %311 = vst.msk [vmem:[#allocation2] sm:$0x3] %vm310, %v305
    // Predicated region
    $region30: #{tpu_custom_call.1} parent=1 // pred_check
      _
    $region31: #{tpu_custom_call.1} parent=1 // pred_check_branch
      %313 = sbr.rel (0) target = $region33
    $region32: #{tpu_custom_call.1} parent=1 // pred_region
      %s315 = ssub.s32 32, 32
      %316 = vsyncadd [#allocation3], %s315
      %s318 = sshll.u32 [#allocation2], 4
      %s319 = int_to_ptr.vmem [resolvable:$true] %s318
      %321 = dma.vmem_to_hbm [thread:$0]  %s319, 32, %s7, [#allocation3]
    $region33: #{tpu_custom_call.1} parent=1 // pred_fallthru
      _
    // Predicated region
    $region34: #{tpu_custom_call.1} parent=1 // pred_check
      _
    $region35: #{tpu_custom_call.1} parent=1 // pred_check_branch
      %323 = sbr.rel (0) target = $region37
    $region36: #{tpu_custom_call.1} parent=1 // pred_region
      %324 = dma.done [#allocation3], 32
    $region37: #{tpu_custom_call.1} parent=1 // pred_fallthru
      _
    %325 = vsyncpa [#allocation3], 1

</llo_original>
